<compile_context>
chip_gen: v5e
topology: v5e:2x2
jax: 0.10.0
libtpu: 0.0.40
codegen_flags: <defaults>
</compile_context>

<pallas_src>
import jax
import jax.numpy as jnp
from jax.experimental import pallas as pl
from jax.experimental.pallas import tpu as pltpu


def _rp_kernel(x_ref, wf_ref, wl_ref, bl_ref, out_ref):
    # x_ref:   (2, TILE_B, D) f32 -- pair of flattened samples for this tile.
    # wf_ref:  (D, E) f32         -- feature projection, VMEM-resident.
    # wl_ref:  (1, E) f32         -- final linear head weights (row).
    # bl_ref:  (1,)   f32         -- final linear head bias, in SMEM.
    # out_ref: (TILE_B, 1) f32    -- logits column for this batch tile.

    # Single feature matmul on the pair difference (feature bias cancels).
    delta = x_ref[0] - x_ref[1]                                   # (TILE_B, D)
    h = jnp.dot(delta, wf_ref[...],
                preferred_element_type=jnp.float32)               # (TILE_B, E)

    # N=1 linear head: broadcast-multiply by the (1, E) row and reduce over E.
    logits = jnp.sum(jnp.abs(h) * wl_ref[...], axis=1, keepdims=True)
    out_ref[...] = (logits + bl_ref[0]).astype(out_ref.dtype)


def _choose_tile_b(batch, d):
    """Batch tile: ~1 MiB x blocks, v7x-VMEM-safe, >=2 tiles when batch allows."""
    x_col_bytes = 2 * d * 4                       # both pair members, f32
    t = (1 << 20) // max(x_col_bytes, 1)          # target ~1 MiB per x block
    t = max(128, min(1024, (t // 128) * 128))
    # Keep double-buffered x blocks well inside v7x's 64 MiB VMEM.
    while t > 128 and 2 * t * x_col_bytes > 24 * (1 << 20):
        t -= 128
    b_pad128 = ((batch + 127) // 128) * 128
    t = min(t, b_pad128)
    # Give v7x's 2 TensorCores at least one tile each when possible.
    if b_pad128 >= 256:
        t = min(t, max(128, ((b_pad128 // 2) // 128) * 128))
    return t


def relative_positioning_forward(x, w_feat, b_feat, w_lin, b_lin, *, tile_b=None):
    """Relative_Positioning.forward.

    x:      (2, B, C, T) float32  -- pair of EEG windows.
    w_feat: (C*T, E)     float32  -- modeled feature extractor (dense proj).
    b_feat: (1, E)       float32  -- cancels exactly in h1 - h2; kept for API
                                     parity but never sent to the device.
    w_lin:  (E, 1), b_lin: (1, 1) -- final nn.Linear(E, 1).
    Returns (B, 1) float32 logits.
    """
    del b_feat  # (x1 @ W + b) - (x2 @ W + b) == (x1 - x2) @ W
    _, B, C, T = x.shape
    D = C * T
    E = w_feat.shape[1]

    if tile_b is None:
        tile_b = _choose_tile_b(B, D)

    # Natural layout: only a (free) reshape of the contiguous input, no
    # transpose/cast HBM round-trip.
    x3 = x.reshape(2, B, D).astype(jnp.float32)                    # (2, B, D)
    num_tiles = pl.cdiv(B, tile_b)
    b_pad = num_tiles * tile_b
    if b_pad != B:
        x3 = jnp.pad(x3, ((0, 0), (0, b_pad - B), (0, 0)))

    wf = w_feat.astype(jnp.float32)                                # (D, E)
    wl = w_lin.reshape(1, E).astype(jnp.float32)                   # (1, E)
    bl = b_lin.reshape(1).astype(jnp.float32)                      # scalar

    # VMEM budget: double-buffered x tiles + double-buffered (resident) weights
    # + tiny output tiles, with headroom; capped so it also fits v7x (64 MiB).
    x_block_bytes = 2 * tile_b * D * 4
    needed = 2 * x_block_bytes + 2 * (D * E * 4) + 2 * (E * 4) + 2 * (tile_b * 4)
    vmem_limit = int(min(max(needed * 2, 16 << 20), 56 << 20))

    flops = 2 * b_pad * D * E + b_pad * D + 3 * b_pad * E
    bytes_accessed = x3.size * 4 + wf.size * 4 + wl.size * 4 + b_pad * 4

    out = pl.pallas_call(
        _rp_kernel,
        out_shape=jax.ShapeDtypeStruct((b_pad, 1), jnp.float32),
        grid=(num_tiles,),
        in_specs=[
            pl.BlockSpec((2, tile_b, D), lambda i: (0, i, 0)),     # batch tiles
            pl.BlockSpec((D, E), lambda i: (0, 0)),                # resident W
            pl.BlockSpec((1, E), lambda i: (0, 0)),                # resident w_lin
            pl.BlockSpec(memory_space=pltpu.MemorySpace.SMEM),     # b_lin scalar
        ],
        out_specs=pl.BlockSpec((tile_b, 1), lambda i: (i, 0)),
        compiler_params=pltpu.CompilerParams(
            dimension_semantics=("parallel",),
            vmem_limit_bytes=vmem_limit,
        ),
        cost_estimate=pl.CostEstimate(
            flops=flops, transcendentals=0, bytes_accessed=bytes_accessed),
    )(x3, wf, wl, bl)

    return out[:B]


def _reference(x, w_feat, b_feat, w_lin, b_lin):
    # Pure-f32 reference of the module math (feature bias included).
    _, B, C, T = x.shape
    x1 = x[0].reshape(B, C * T)
    x2 = x[1].reshape(B, C * T)
    h1 = x1 @ w_feat + b_feat
    h2 = x2 @ w_feat + b_feat
    return jnp.abs(h1 - h2) @ w_lin + b_lin


if __name__ == "__main__":
    # Small shapes consistent with the module: pair of B EEG windows,
    # C channels, T time samples, embedding_dim=32.
    B, C, T, E = 4, 4, 16, 32
    D = C * T

    key = jax.random.PRNGKey(0)
    k_x, k_wf, k_bf, k_wl, k_bl = jax.random.split(key, 5)

    x = jax.random.normal(k_x, (2, B, C, T), dtype=jnp.float32)
    w_feat = jax.random.normal(k_wf, (D, E), dtype=jnp.float32) * 0.1
    b_feat = jax.random.normal(k_bf, (1, E), dtype=jnp.float32) * 0.1
    w_lin = jax.random.normal(k_wl, (E, 1), dtype=jnp.float32) * 0.1
    b_lin = jax.random.normal(k_bl, (1, 1), dtype=jnp.float32) * 0.1

    fwd = jax.jit(relative_positioning_forward)
    out = jax.block_until_ready(fwd(x, w_feat, b_feat, w_lin, b_lin))

    ref = _reference(x, w_feat, b_feat, w_lin, b_lin)
    assert out.shape == (B, 1), out.shape
    assert jnp.allclose(out, ref, atol=1e-3, rtol=1e-3), (out, ref)

    print("KERNEL_OK")
</pallas_src>

<mosaic_0001>
module attributes {stable_mosaic.version = 11 : i64} {
  func.func @_rp_kernel(%arg0: i32, %arg1: memref<2x128x64xf32, #tpu.memory_space<vmem>>, %arg2: memref<64x32xf32, #tpu.memory_space<vmem>>, %arg3: memref<1x32xf32, #tpu.memory_space<vmem>>, %arg4: memref<1xf32, #tpu.memory_space<smem>>, %arg5: memref<128x1xf32, #tpu.memory_space<vmem>>) attributes {dimension_semantics = [#tpu.dimension_semantics<parallel>], iteration_bounds = array<i64: 1>, scalar_prefetch = 0 : i64, scratch_operands = 0 : i64, tpu.core_type = #tpu.core_type<tc>, window_params = [{transform_indices = @transform_0, window_bounds = array<i64: 2, 128, 64>}, {pipeline_mode = #tpu.pipeline_mode<synchronous>, transform_indices = @transform_1, window_bounds = array<i64: 64, 32>}, {pipeline_mode = #tpu.pipeline_mode<synchronous>, transform_indices = @transform_2, window_bounds = array<i64: 1, 32>}, {transform_indices = @transform_3, window_bounds = array<i64: 1>}, {transform_indices = @transform_4, window_bounds = array<i64: 128, 1>}]} {
    %c0 = arith.constant 0 : index
    %c0_0 = arith.constant 0 : index
    %c0_1 = arith.constant 0 : index
    %0 = vector.load %arg1[%c0, %c0_0, %c0_1] : memref<2x128x64xf32, #tpu.memory_space<vmem>>, vector<1x128x64xf32>
    %1 = vector.shape_cast %0 : vector<1x128x64xf32> to vector<128x64xf32>
    %c1 = arith.constant 1 : index
    %c0_2 = arith.constant 0 : index
    %c0_3 = arith.constant 0 : index
    %2 = vector.load %arg1[%c1, %c0_2, %c0_3] : memref<2x128x64xf32, #tpu.memory_space<vmem>>, vector<1x128x64xf32>
    %3 = vector.shape_cast %2 : vector<1x128x64xf32> to vector<128x64xf32>
    %4 = arith.subf %1, %3 : vector<128x64xf32>
    %c0_4 = arith.constant 0 : index
    %c0_5 = arith.constant 0 : index
    %5 = vector.load %arg2[%c0_4, %c0_5] : memref<64x32xf32, #tpu.memory_space<vmem>>, vector<64x32xf32>
    %cst = arith.constant dense<0.000000e+00> : vector<128x32xf32>
    %6 = tpu.matmul %4, %5, %cst {dimension_numbers = #tpu.dot_dimension_numbers<[1], [0], [0], [1], [0, 0, 1, 1], [], []>} : vector<128x64xf32>, vector<64x32xf32>, vector<128x32xf32> -> vector<128x32xf32>
    %7 = math.absf %6 : vector<128x32xf32>
    %c0_6 = arith.constant 0 : index
    %c0_7 = arith.constant 0 : index
    %8 = vector.load %arg3[%c0_6, %c0_7] : memref<1x32xf32, #tpu.memory_space<vmem>>, vector<1x32xf32>
    %9 = vector.broadcast %8 : vector<1x32xf32> to vector<128x32xf32>
    %10 = arith.mulf %7, %9 : vector<128x32xf32>
    %cst_8 = arith.constant dense<0.000000e+00> : vector<128xf32>
    %11 = vector.multi_reduction <add>, %10, %cst_8 [1] : vector<128x32xf32> to vector<128xf32>
    %12 = vector.shape_cast %11 : vector<128xf32> to vector<128x1xf32>
    %c0_9 = arith.constant 0 : index
    %13 = memref.load %arg4[%c0_9] : memref<1xf32, #tpu.memory_space<smem>>
    %14 = vector.broadcast %13 : f32 to vector<128x1xf32>
    %15 = arith.addf %12, %14 : vector<128x1xf32>
    %c0_10 = arith.constant 0 : index
    %c0_11 = arith.constant 0 : index
    %16 = vector.load %arg5[%c0_10, %c0_11] : memref<128x1xf32, #tpu.memory_space<vmem>>, vector<128x1xf32>
    tpu.vector_store %arg5[%c0_10, %c0_11], %15 {strides = array<i32>} : memref<128x1xf32, #tpu.memory_space<vmem>>, vector<128x1xf32>,
    return
  }
  func.func @transform_0(%arg0: i32) -> (i32, i32, i32) {
    %c0_i32 = arith.constant 0 : i32
    %c0_i32_0 = arith.constant 0 : i32
    %c0_i32_1 = arith.constant 0 : i32
    return %c0_i32, %arg0, %c0_i32_0 : i32, i32, i32
  }
  func.func @transform_1(%arg0: i32) -> (i32, i32) {
    %c0_i32 = arith.constant 0 : i32
    %c0_i32_0 = arith.constant 0 : i32
    %c0_i32_1 = arith.constant 0 : i32
    return %c0_i32, %c0_i32_0 : i32, i32
  }
  func.func @transform_2(%arg0: i32) -> (i32, i32) {
    %c0_i32 = arith.constant 0 : i32
    %c0_i32_0 = arith.constant 0 : i32
    %c0_i32_1 = arith.constant 0 : i32
    return %c0_i32, %c0_i32_0 : i32, i32
  }
  func.func @transform_3(%arg0: i32) -> i32 {
    %c0_i32 = arith.constant 0 : i32
    %c0_i32_0 = arith.constant 0 : i32
    return %c0_i32 : i32
  }
  func.func @transform_4(%arg0: i32) -> (i32, i32) {
    %c0_i32 = arith.constant 0 : i32
    %c0_i32_0 = arith.constant 0 : i32
    return %arg0, %c0_i32 : i32, i32
  }
}

</mosaic_0001>

<llo_original>
// kernel: relative_positioning_forward.1
$region0: #{relative_positioning_forward.1}
  #allocation0 [shape = 'u32[]', space=smem, size = 0x4, offset = 0x4, fixed_abs, tag = 'smem constant byte address 0x4 - core index']
  #allocation1 [shape = 'u32[72,128]{1,0:T(1,128)}', space=vmem, size = 0x9000, scoped, tag = 'internal scratch']
  #allocation2 [shape = 'f32[1]{0:T(128)S(6)}', space=smem, size = 0x200, scoped, tag = 'scoped memory for relative_positioning_forward.1']
  %s0 = inlined_call_operand.vmem [shape: f32[2,128,64], index: 0, kind: input, shape index: {}]
  %s1 = inlined_call_operand.vmem [shape: f32[64,32], index: 1, kind: input, shape index: {}]
  %s2 = inlined_call_operand.vmem [shape: f32[1,32], index: 2, kind: input, shape index: {}]
  %s3 = inlined_call_operand.<no memory space> [shape: f32[1], index: 3, kind: input, shape index: {}]
  %s4 = inlined_call_operand.vmem [shape: f32[128,1], index: 4, kind: output, shape index: {}]
  %s5 = sld [smem:[#allocation0]]
  $region26: #{relative_positioning_forward.1} parent=0
    _
  %s7 = ssub.s32 1, %s5
  %s8 = scalar_select 0, %s7, %s5
  %9 = sst [smem:[#allocation2]] %s3
  // Predicated region
  $region2: #{relative_positioning_forward.1} parent=0 // pred_check
    _
  $region3: #{relative_positioning_forward.1} parent=0 // pred_check_branch
    %11 = sbr.rel (0) target = $region5
  $region4: #{relative_positioning_forward.1} parent=0 // pred_region
    _
  $region5: #{relative_positioning_forward.1} parent=0 // pred_fallthru
    _
  // Predicated region
  $region6: #{relative_positioning_forward.1} parent=0 // pred_check
    _
  $region7: #{relative_positioning_forward.1} parent=0 // pred_check_branch
    %13 = sbr.rel (0) target = $region9
  $region8: #{relative_positioning_forward.1} parent=0 // pred_region
    _
  $region9: #{relative_positioning_forward.1} parent=0 // pred_fallthru
    _
  // Predicated region
  $region10: #{relative_positioning_forward.1} parent=0 // pred_check
    _
  $region11: #{relative_positioning_forward.1} parent=0 // pred_check_branch
    %15 = sbr.rel (0) target = $region13
  $region12: #{relative_positioning_forward.1} parent=0 // pred_region
    _
  $region13: #{relative_positioning_forward.1} parent=0 // pred_fallthru
    _
  // Predicated region
  $region14: #{relative_positioning_forward.1} parent=0 // pred_check
    _
  $region15: #{relative_positioning_forward.1} parent=0 // pred_check_branch
    %17 = sbr.rel (0) target = $region17
  $region16: #{relative_positioning_forward.1} parent=0 // pred_region
    _
  $region17: #{relative_positioning_forward.1} parent=0 // pred_fallthru
    _
  %v18 = vld [vmem:[%s0] sm:$0xff]
  %v19 = vld [vmem:[%s0 + $0x8] sm:$0xff]
  %v20 = vld [vmem:[%s0 + $0x10] sm:$0xff]
  %v21 = vld [vmem:[%s0 + $0x18] sm:$0xff]
  %v22 = vld [vmem:[%s0 + $0x20] sm:$0xff]
  %v23 = vld [vmem:[%s0 + $0x28] sm:$0xff]
  %v24 = vld [vmem:[%s0 + $0x30] sm:$0xff]
  %v25 = vld [vmem:[%s0 + $0x38] sm:$0xff]
  %v26 = vld [vmem:[%s0 + $0x40] sm:$0xff]
  %v27 = vld [vmem:[%s0 + $0x48] sm:$0xff]
  %v28 = vld [vmem:[%s0 + $0x50] sm:$0xff]
  %v29 = vld [vmem:[%s0 + $0x58] sm:$0xff]
  %v30 = vld [vmem:[%s0 + $0x60] sm:$0xff]
  %v31 = vld [vmem:[%s0 + $0x68] sm:$0xff]
  %v32 = vld [vmem:[%s0 + $0x70] sm:$0xff]
  %v33 = vld [vmem:[%s0 + $0x78] sm:$0xff]
  %s34 = scalar_lea.vmem %s0, 128
  %v35 = vld [vmem:[%s34] sm:$0xff]
  %v36 = vld [vmem:[%s34 + $0x8] sm:$0xff]
  %v37 = vld [vmem:[%s34 + $0x10] sm:$0xff]
  %v38 = vld [vmem:[%s34 + $0x18] sm:$0xff]
  %v39 = vld [vmem:[%s34 + $0x20] sm:$0xff]
  %v40 = vld [vmem:[%s34 + $0x28] sm:$0xff]
  %v41 = vld [vmem:[%s34 + $0x30] sm:$0xff]
  %v42 = vld [vmem:[%s34 + $0x38] sm:$0xff]
  %v43 = vld [vmem:[%s34 + $0x40] sm:$0xff]
  %v44 = vld [vmem:[%s34 + $0x48] sm:$0xff]
  %v45 = vld [vmem:[%s34 + $0x50] sm:$0xff]
  %v46 = vld [vmem:[%s34 + $0x58] sm:$0xff]
  %v47 = vld [vmem:[%s34 + $0x60] sm:$0xff]
  %v48 = vld [vmem:[%s34 + $0x68] sm:$0xff]
  %v49 = vld [vmem:[%s34 + $0x70] sm:$0xff]
  %v50 = vld [vmem:[%s34 + $0x78] sm:$0xff]
  %v51 = vsub.f32 %v18, %v35
  %v52 = vsub.f32 %v19, %v36
  %v53 = vsub.f32 %v20, %v37
  %v54 = vsub.f32 %v21, %v38
  %v55 = vsub.f32 %v22, %v39
  %v56 = vsub.f32 %v23, %v40
  %v57 = vsub.f32 %v24, %v41
  %v58 = vsub.f32 %v25, %v42
  %v59 = vsub.f32 %v26, %v43
  %v60 = vsub.f32 %v27, %v44
  %v61 = vsub.f32 %v28, %v45
  %v62 = vsub.f32 %v29, %v46
  %v63 = vsub.f32 %v30, %v47
  %v64 = vsub.f32 %v31, %v48
  %v65 = vsub.f32 %v32, %v49
  %v66 = vsub.f32 %v33, %v50
  %v67 = vld [vmem:[%s1] sm:$0xff]
  %v68 = vld [vmem:[%s1 + $0x8] sm:$0xff]
  %v69 = vld [vmem:[%s1 + $0x10] sm:$0xff]
  %v70 = vld [vmem:[%s1 + $0x18] sm:$0xff]
  %v71 = vld [vmem:[%s1 + $0x20] sm:$0xff]
  %v72 = vld [vmem:[%s1 + $0x28] sm:$0xff]
  %v73 = vld [vmem:[%s1 + $0x30] sm:$0xff]
  %v74 = vld [vmem:[%s1 + $0x38] sm:$0xff]
  %vm75 = vcmask 523264
  %v77 = vsel %vm75, %v51, 0
  %v80 = vsel %vm75, %v52, 0
  %v83 = vsel %vm75, %v53, 0
  %v86 = vsel %vm75, %v54, 0
  %v89 = vsel %vm75, %v55, 0
  %v92 = vsel %vm75, %v56, 0
  %v95 = vsel %vm75, %v57, 0
  %v98 = vsel %vm75, %v58, 0
  %v101 = vsel %vm75, %v59, 0
  %v104 = vsel %vm75, %v60, 0
  %v107 = vsel %vm75, %v61, 0
  %v110 = vsel %vm75, %v62, 0
  %v113 = vsel %vm75, %v63, 0
  %v116 = vsel %vm75, %v64, 0
  %v119 = vsel %vm75, %v65, 0
  %v122 = vsel %vm75, %v66, 0
  %124 = vmatpush.msra.mxu0 0.0
  %125 = vmatpush.msra.mxu0 0.0
  %126 = vmatpush.msra.mxu0 0.0
  %127 = vmatpush.msra.mxu0 0.0
  %128 = vmatpush.msra.mxu0 0.0
  %129 = vmatpush.msra.mxu0 0.0
  %130 = vmatpush.msra.mxu0 0.0
  %131 = vmatpush.msra.mxu0 0.0
  %132 = vmatpush.msra.mxu0 %v74
  %133 = vmatpush.msra.mxu0 %v73
  %134 = vmatpush.msra.mxu0 %v72
  %135 = vmatpush.msra.mxu0 %v71
  %136 = vmatpush.msra.mxu0 %v70
  %137 = vmatpush.msra.mxu0 %v69
  %138 = vmatpush.msra.mxu0 %v68
  %139 = vmatpush.msra.mxu0 %v67
  %140 = vmatmul.f32.gmra.mxu0 %v77
  %v141 = vpop.f32.mrf.mxu0
  %v142 = vadd.f32 0.0, %v141
  %143 = vmatmul.f32.gmra.mxu0 %v80
  %v144 = vpop.f32.mrf.mxu0
  %v145 = vadd.f32 0.0, %v144
  %146 = vmatmul.f32.gmra.mxu0 %v83
  %v147 = vpop.f32.mrf.mxu0
  %v148 = vadd.f32 0.0, %v147
  %149 = vmatmul.f32.gmra.mxu0 %v86
  %v150 = vpop.f32.mrf.mxu0
  %v151 = vadd.f32 0.0, %v150
  %152 = vmatmul.f32.gmra.mxu0 %v89
  %v153 = vpop.f32.mrf.mxu0
  %v154 = vadd.f32 0.0, %v153
  %155 = vmatmul.f32.gmra.mxu0 %v92
  %v156 = vpop.f32.mrf.mxu0
  %v157 = vadd.f32 0.0, %v156
  %158 = vmatmul.f32.gmra.mxu0 %v95
  %v159 = vpop.f32.mrf.mxu0
  %v160 = vadd.f32 0.0, %v159
  %161 = vmatmul.f32.gmra.mxu0 %v98
  %v162 = vpop.f32.mrf.mxu0
  %v163 = vadd.f32 0.0, %v162
  %164 = vmatmul.f32.gmra.mxu0 %v101
  %v165 = vpop.f32.mrf.mxu0
  %v166 = vadd.f32 0.0, %v165
  %167 = vmatmul.f32.gmra.mxu0 %v104
  %v168 = vpop.f32.mrf.mxu0
  %v169 = vadd.f32 0.0, %v168
  %170 = vmatmul.f32.gmra.mxu0 %v107
  %v171 = vpop.f32.mrf.mxu0
  %v172 = vadd.f32 0.0, %v171
  %173 = vmatmul.f32.gmra.mxu0 %v110
  %v174 = vpop.f32.mrf.mxu0
  %v175 = vadd.f32 0.0, %v174
  %176 = vmatmul.f32.gmra.mxu0 %v113
  %v177 = vpop.f32.mrf.mxu0
  %v178 = vadd.f32 0.0, %v177
  %179 = vmatmul.f32.gmra.mxu0 %v116
  %v180 = vpop.f32.mrf.mxu0
  %v181 = vadd.f32 0.0, %v180
  %182 = vmatmul.f32.gmra.mxu0 %v119
  %v183 = vpop.f32.mrf.mxu0
  %v184 = vadd.f32 0.0, %v183
  %185 = vmatmul.f32.gmra.mxu0 %v122
  %v186 = vpop.f32.mrf.mxu0
  %v187 = vadd.f32 0.0, %v186
  %188 = vdwg.mxu0
  %v189 = vand.u32 2147483647, %v142
  %v190 = vand.u32 2147483647, %v145
  %v191 = vand.u32 2147483647, %v148
  %v192 = vand.u32 2147483647, %v151
  %v193 = vand.u32 2147483647, %v154
  %v194 = vand.u32 2147483647, %v157
  %v195 = vand.u32 2147483647, %v160
  %v196 = vand.u32 2147483647, %v163
  %v197 = vand.u32 2147483647, %v166
  %v198 = vand.u32 2147483647, %v169
  %v199 = vand.u32 2147483647, %v172
  %v200 = vand.u32 2147483647, %v175
  %v201 = vand.u32 2147483647, %v178
  %v202 = vand.u32 2147483647, %v181
  %v203 = vand.u32 2147483647, %v184
  %v204 = vand.u32 2147483647, %v187
  %v205 = vld [vmem:[%s2] sm:$0x1]
  %v207 = vperm.slane %v205, 0
  %v209 = vmul.f32 %v189, %v207
  %v210 = vmul.f32 %v190, %v207
  %v211 = vmul.f32 %v191, %v207
  %v212 = vmul.f32 %v192, %v207
  %v213 = vmul.f32 %v193, %v207
  %v214 = vmul.f32 %v194, %v207
  %v215 = vmul.f32 %v195, %v207
  %v216 = vmul.f32 %v196, %v207
  %v217 = vmul.f32 %v197, %v207
  %v218 = vmul.f32 %v198, %v207
  %v219 = vmul.f32 %v199, %v207
  %v220 = vmul.f32 %v200, %v207
  %v221 = vmul.f32 %v201, %v207
  %v222 = vmul.f32 %v202, %v207
  %v223 = vmul.f32 %v203, %v207
  %v224 = vmul.f32 %v204, %v207
  %vm225 = vcmask 261120
  %v226 = vsel %vm225, %v209, 0.0
  %227 = vadd.xlane.f32.xlu0 %v226
  %v228 = vpop.xlane.xlu0 %227
  %v229 = vsel %vm225, %v210, 0.0
  %230 = vadd.xlane.f32.xlu0 %v229
  %v231 = vpop.xlane.xlu0 %230
  %v232 = vsel %vm225, %v211, 0.0
  %233 = vadd.xlane.f32.xlu0 %v232
  %v234 = vpop.xlane.xlu0 %233
  %v235 = vsel %vm225, %v212, 0.0
  %236 = vadd.xlane.f32.xlu0 %v235
  %v237 = vpop.xlane.xlu0 %236
  %v238 = vsel %vm225, %v213, 0.0
  %239 = vadd.xlane.f32.xlu0 %v238
  %v240 = vpop.xlane.xlu0 %239
  %v241 = vsel %vm225, %v214, 0.0
  %242 = vadd.xlane.f32.xlu0 %v241
  %v243 = vpop.xlane.xlu0 %242
  %v244 = vsel %vm225, %v215, 0.0
  %245 = vadd.xlane.f32.xlu0 %v244
  %v246 = vpop.xlane.xlu0 %245
  %v247 = vsel %vm225, %v216, 0.0
  %248 = vadd.xlane.f32.xlu0 %v247
  %v249 = vpop.xlane.xlu0 %248
  %v250 = vsel %vm225, %v217, 0.0
  %251 = vadd.xlane.f32.xlu0 %v250
  %v252 = vpop.xlane.xlu0 %251
  %v253 = vsel %vm225, %v218, 0.0
  %254 = vadd.xlane.f32.xlu0 %v253
  %v255 = vpop.xlane.xlu0 %254
  %v256 = vsel %vm225, %v219, 0.0
  %257 = vadd.xlane.f32.xlu0 %v256
  %v258 = vpop.xlane.xlu0 %257
  %v259 = vsel %vm225, %v220, 0.0
  %260 = vadd.xlane.f32.xlu0 %v259
  %v261 = vpop.xlane.xlu0 %260
  %v262 = vsel %vm225, %v221, 0.0
  %263 = vadd.xlane.f32.xlu0 %v262
  %v264 = vpop.xlane.xlu0 %263
  %v265 = vsel %vm225, %v222, 0.0
  %266 = vadd.xlane.f32.xlu0 %v265
  %v267 = vpop.xlane.xlu0 %266
  %v268 = vsel %vm225, %v223, 0.0
  %269 = vadd.xlane.f32.xlu0 %v268
  %v270 = vpop.xlane.xlu0 %269
  %v271 = vsel %vm225, %v224, 0.0
  %272 = vadd.xlane.f32.xlu0 %v271
  %v273 = vpop.xlane.xlu0 %272
  %s274 = sld [smem:[#allocation2]]
  %v275 = vstv %s274
  %v276 = vadd.f32 %v228, %v275
  %v277 = vadd.f32 %v231, %v275
  %v278 = vadd.f32 %v234, %v275
  %v279 = vadd.f32 %v237, %v275
  %v280 = vadd.f32 %v240, %v275
  %v281 = vadd.f32 %v243, %v275
  %v282 = vadd.f32 %v246, %v275
  %v283 = vadd.f32 %v249, %v275
  %v284 = vadd.f32 %v252, %v275
  %v285 = vadd.f32 %v255, %v275
  %v286 = vadd.f32 %v258, %v275
  %v287 = vadd.f32 %v261, %v275
  %v288 = vadd.f32 %v264, %v275
  %v289 = vadd.f32 %v267, %v275
  %v290 = vadd.f32 %v270, %v275
  %v291 = vadd.f32 %v273, %v275
  %vm292 = vcmask 7168
  %293 = vst.msk [vmem:[%s4] sm:$0xff] %vm292, %v276
  %294 = vst.msk [vmem:[%s4 + $0x8] sm:$0xff] %vm292, %v277
  %295 = vst.msk [vmem:[%s4 + $0x10] sm:$0xff] %vm292, %v278
  %296 = vst.msk [vmem:[%s4 + $0x18] sm:$0xff] %vm292, %v279
  %297 = vst.msk [vmem:[%s4 + $0x20] sm:$0xff] %vm292, %v280
  %298 = vst.msk [vmem:[%s4 + $0x28] sm:$0xff] %vm292, %v281
  %299 = vst.msk [vmem:[%s4 + $0x30] sm:$0xff] %vm292, %v282
  %300 = vst.msk [vmem:[%s4 + $0x38] sm:$0xff] %vm292, %v283
  %301 = vst.msk [vmem:[%s4 + $0x40] sm:$0xff] %vm292, %v284
  %302 = vst.msk [vmem:[%s4 + $0x48] sm:$0xff] %vm292, %v285
  %303 = vst.msk [vmem:[%s4 + $0x50] sm:$0xff] %vm292, %v286
  %304 = vst.msk [vmem:[%s4 + $0x58] sm:$0xff] %vm292, %v287
  %305 = vst.msk [vmem:[%s4 + $0x60] sm:$0xff] %vm292, %v288
  %306 = vst.msk [vmem:[%s4 + $0x68] sm:$0xff] %vm292, %v289
  %307 = vst.msk [vmem:[%s4 + $0x70] sm:$0xff] %vm292, %v290
  %308 = vst.msk [vmem:[%s4 + $0x78] sm:$0xff] %vm292, %v291
  // Predicated region
  $region18: #{relative_positioning_forward.1} parent=0 // pred_check
    _
  $region19: #{relative_positioning_forward.1} parent=0 // pred_check_branch
    %310 = sbr.rel (0) target = $region21
  $region20: #{relative_positioning_forward.1} parent=0 // pred_region
    _
  $region21: #{relative_positioning_forward.1} parent=0 // pred_fallthru
    _
  // Predicated region
  $region22: #{relative_positioning_forward.1} parent=0 // pred_check
    _
  $region23: #{relative_positioning_forward.1} parent=0 // pred_check_branch
    %312 = sbr.rel (0) target = $region25
  $region24: #{relative_positioning_forward.1} parent=0 // pred_region
    _
  $region25: #{relative_positioning_forward.1} parent=0 // pred_fallthru
    _

</llo_original>
